<compile_context>
chip_gen: v7x
topology: tpu7x:2x2x1
jax: 0.10.0
libtpu: 0.0.40
codegen_flags: <defaults>
</compile_context>

<pallas_src>
import functools

import jax
import jax.numpy as jnp
from jax.experimental import pallas as pl
from jax.experimental.pallas import tpu as pltpu


# ----------------------------- model config ---------------------------------
CIN = 3            # xyz coordinates
CIN_PAD = 8        # input channels padded 3 -> 8 (sublane friendly; zero-padded)
C1 = 32            # first pointwise MLP width
C2 = 64            # second pointwise MLP width
NCLS = 8           # number of classes
NCLS_PAD = 128     # logits padded to a full 128-lane register (lane-dense store)


def _round_up(x, m):
    return ((x + m - 1) // m) * m


# ------------------------------ Pallas kernel --------------------------------
def pointnet_kernel(pc_ref, w1t_ref, b1_ref, w2t_ref, b2_ref, w3_ref, b3_ref,
                    out_ref, gmax_ref, *, tb):
    """Grid = (batch_block, point_tile).

    pc_ref  : (TB, CIN_PAD, TN)  channels-first point tile (points on lanes)
    w1t_ref : (C1, CIN_PAD)      b1_ref : (C1, 1)
    w2t_ref : (C2, C1)           b2_ref : (C2, 1)
    w3_ref  : (C2, NCLS_PAD)     b3_ref : (1, NCLS_PAD)
    out_ref : (TB, NCLS_PAD)     logits block (written once, on the last tile)
    gmax_ref: (C2, TB)           running global-max-pool accumulator (scratch)
    """
    pt = pl.program_id(1)

    @pl.when(pt == 0)
    def _():
        gmax_ref[...] = jnp.full_like(gmax_ref, -jnp.inf)

    w1t = w1t_ref[...]
    b1 = b1_ref[...]
    w2t = w2t_ref[...]
    b2 = b2_ref[...]

    # Pointwise MLP in channels-first layout: the point axis (TN, multiple of
    # 128) is the lane dimension, so bias-add / ReLU / the max reduce all run
    # on fully occupied vregs.  TB is small, so a static unroll is fine.
    for b in range(tb):
        pc_b = pc_ref[b]                                            # (CIN_PAD, TN)
        h1 = jnp.dot(w1t, pc_b, preferred_element_type=jnp.float32)
        h1 = jnp.maximum(h1 + b1, 0.0)                              # (C1, TN)
        h2 = jnp.dot(w2t, h1, preferred_element_type=jnp.float32)
        h2 = jnp.maximum(h2 + b2, 0.0)                              # (C2, TN)
        m_b = jnp.max(h2, axis=-1, keepdims=True)                   # (C2, 1)
        gmax_ref[:, b:b + 1] = jnp.maximum(gmax_ref[:, b:b + 1], m_b)

    # Classifier head: once per batch block, on the final point tile only.
    # logits[b, n] = sum_c g[c, b] * w3[c, n]  -- expressed as a broadcast
    # multiply + sublane reduce to avoid any transposed/tiny-K MXU matmul.
    @pl.when(pt == pl.num_programs(1) - 1)
    def _():
        w3 = w3_ref[...]                                            # (C2, NCLS_PAD)
        b3 = b3_ref[...]                                            # (1, NCLS_PAD)
        for b in range(tb):
            g_b = gmax_ref[:, b:b + 1]                              # (C2, 1)
            logits_b = jnp.sum(w3 * g_b, axis=0, keepdims=True) + b3
            out_ref[b:b + 1, :] = logits_b                          # (1, NCLS_PAD)


def pointnet_forward(pc, params):
    """pc: [B, N, 3] float32 -> logits [B, NCLS]."""
    w1, b1, w2, b2, w3, b3 = params
    B, N, _ = pc.shape

    # ---- tiling --------------------------------------------------------------
    TB = B if B <= 8 else 8                      # batch elements per grid step
    assert B % TB == 0, "B must be a multiple of the batch block"
    TN = min(512, _round_up(N, 128))             # points per tile (lane multiple)
    N_PAD = _round_up(N, TN)

    # ---- layout prep (cheap XLA glue) ----------------------------------------
    # channels-first; channels zero-padded 3 -> CIN_PAD (zero weight rows make
    # them inert); points edge-padded (duplicated points cannot change the max).
    x = jnp.transpose(pc, (0, 2, 1))                                # (B, CIN, N)
    x = jnp.pad(x, ((0, 0), (0, CIN_PAD - CIN), (0, 0)))            # (B, CIN_PAD, N)
    x = jnp.pad(x, ((0, 0), (0, 0), (0, N_PAD - N)), mode="edge")   # (B, CIN_PAD, N_PAD)

    w1t = jnp.pad(w1, ((0, CIN_PAD - CIN), (0, 0))).T               # (C1, CIN_PAD)
    b1c = b1.reshape(C1, 1)
    w2t = w2.T                                                      # (C2, C1)
    b2c = b2.reshape(C2, 1)
    w3p = jnp.pad(w3, ((0, 0), (0, NCLS_PAD - NCLS)))               # (C2, NCLS_PAD)
    b3p = jnp.pad(b3.reshape(1, NCLS), ((0, 0), (0, NCLS_PAD - NCLS)))

    kernel = functools.partial(pointnet_kernel, tb=TB)

    logits_pad = pl.pallas_call(
        kernel,
        out_shape=jax.ShapeDtypeStruct((B, NCLS_PAD), jnp.float32),
        grid_spec=pltpu.PrefetchScalarGridSpec(
            num_scalar_prefetch=0,
            grid=(B // TB, N_PAD // TN),
            in_specs=[
                pl.BlockSpec((TB, CIN_PAD, TN), lambda bb, pt: (bb, 0, pt)),
                pl.BlockSpec((C1, CIN_PAD), lambda bb, pt: (0, 0)),
                pl.BlockSpec((C1, 1), lambda bb, pt: (0, 0)),
                pl.BlockSpec((C2, C1), lambda bb, pt: (0, 0)),
                pl.BlockSpec((C2, 1), lambda bb, pt: (0, 0)),
                pl.BlockSpec((C2, NCLS_PAD), lambda bb, pt: (0, 0)),
                pl.BlockSpec((1, NCLS_PAD), lambda bb, pt: (0, 0)),
            ],
            out_specs=pl.BlockSpec((TB, NCLS_PAD), lambda bb, pt: (bb, 0)),
            scratch_shapes=[pltpu.VMEM((C2, TB), jnp.float32)],
        ),
        compiler_params=pltpu.CompilerParams(
            dimension_semantics=("parallel", "arbitrary")),
    )(x, w1t, b1c, w2t, b2c, w3p, b3p)

    return logits_pad[:, :NCLS]                                     # [B, NCLS]


# ------------------------------ DropAttack ------------------------------------
def random_drop(pc, key, drop_num):
    """Drop `drop_num` random points from each cloud: [B, K, 3] -> [B, K-drop, 3]."""
    # TODO(synk): the per-batch random gather without replacement is data-dependent
    # indexing done in plain JAX (vmapped), not inside the Pallas kernel.
    B, K, _ = pc.shape
    keys = jax.random.split(key, B)

    def drop_one(p, k):
        idx = jax.random.permutation(k, K)[: K - drop_num]
        return p[idx]

    return jax.vmap(drop_one)(pc, keys)


def drop_attack_forward(x, target, params, key, drop_num):
    """Mirrors DropAttack.forward: returns (dropped point cloud, #correct preds)."""
    pc = random_drop(x, key, drop_num)          # [B, K-drop, 3]
    logits = pointnet_forward(pc, params)       # [B, NCLS]
    pred = jnp.argmax(logits, axis=-1)
    acc_num = jnp.sum(pred == target).astype(jnp.int32)
    return pc, acc_num


# ------------------------------- main -----------------------------------------
if __name__ == "__main__":
    B, K, DROP = 2, 64, 16          # small shapes; N = K - DROP = 48

    root = jax.random.PRNGKey(0)
    k_x, k_t, k_drop, k_w1, k_w2, k_w3 = jax.random.split(root, 6)

    # deterministic synthetic "victim model" parameters
    w1 = jax.random.normal(k_w1, (CIN, C1), jnp.float32) * 0.1
    b1 = jnp.zeros((C1,), jnp.float32)
    w2 = jax.random.normal(k_w2, (C1, C2), jnp.float32) * 0.1
    b2 = jnp.zeros((C2,), jnp.float32)
    w3 = jax.random.normal(k_w3, (C2, NCLS), jnp.float32) * 0.1
    b3 = jnp.zeros((NCLS,), jnp.float32)
    params = (w1, b1, w2, b2, w3, b3)

    # deterministic inputs
    x = jax.random.normal(k_x, (B, K, CIN), jnp.float32)      # [B, K, 3] point clouds
    target = jax.random.randint(k_t, (B,), 0, NCLS)           # [B] class labels

    fwd = jax.jit(functools.partial(drop_attack_forward, drop_num=DROP))
    pc_out, acc_num = fwd(x, target, params, k_drop)
    jax.block_until_ready((pc_out, acc_num))

    assert pc_out.shape == (B, K - DROP, CIN)
    assert 0 <= int(acc_num) <= B
    print("KERNEL_OK")
</pallas_src>

<mosaic_0001>
module attributes {stable_mosaic.version = 11 : i64} {
  func.func @pointnet_kernel(%arg0: i32, %arg1: i32, %arg2: memref<2x8x128xf32, #tpu.memory_space<vmem>>, %arg3: memref<32x8xf32, #tpu.memory_space<vmem>>, %arg4: memref<32x1xf32, #tpu.memory_space<vmem>>, %arg5: memref<64x32xf32, #tpu.memory_space<vmem>>, %arg6: memref<64x1xf32, #tpu.memory_space<vmem>>, %arg7: memref<64x128xf32, #tpu.memory_space<vmem>>, %arg8: memref<1x128xf32, #tpu.memory_space<vmem>>, %arg9: memref<2x128xf32, #tpu.memory_space<vmem>>, %arg10: memref<64x2xf32, #tpu.memory_space<vmem>>) attributes {dimension_semantics = [#tpu.dimension_semantics<parallel>, #tpu.dimension_semantics<arbitrary>], iteration_bounds = array<i64: 1, 1>, scalar_prefetch = 0 : i64, scratch_operands = 1 : i64, tpu.core_type = #tpu.core_type<tc>, window_params = [{transform_indices = @transform_0, window_bounds = array<i64: 2, 8, 128>}, {pipeline_mode = #tpu.pipeline_mode<synchronous>, transform_indices = @transform_1, window_bounds = array<i64: 32, 8>}, {pipeline_mode = #tpu.pipeline_mode<synchronous>, transform_indices = @transform_2, window_bounds = array<i64: 32, 1>}, {pipeline_mode = #tpu.pipeline_mode<synchronous>, transform_indices = @transform_3, window_bounds = array<i64: 64, 32>}, {pipeline_mode = #tpu.pipeline_mode<synchronous>, transform_indices = @transform_4, window_bounds = array<i64: 64, 1>}, {pipeline_mode = #tpu.pipeline_mode<synchronous>, transform_indices = @transform_5, window_bounds = array<i64: 64, 128>}, {pipeline_mode = #tpu.pipeline_mode<synchronous>, transform_indices = @transform_6, window_bounds = array<i64: 1, 128>}, {transform_indices = @transform_7, window_bounds = array<i64: 2, 128>}]} {
    %c0_i32 = arith.constant 0 : i32
    %0 = arith.cmpi eq, %arg1, %c0_i32 : i32
    %1 = arith.extui %0 : i1 to i32
    %c0_i32_0 = arith.constant 0 : i32
    %2 = arith.cmpi ne, %1, %c0_i32_0 : i32
    scf.if %2 {
      %cst_32 = arith.constant 0xFF800000 : f32
      %44 = vector.broadcast %cst_32 : f32 to vector<64x2xf32>
      %c0_33 = arith.constant 0 : index
      %c0_34 = arith.constant 0 : index
      %45 = vector.load %arg10[%c0_33, %c0_34] : memref<64x2xf32, #tpu.memory_space<vmem>>, vector<64x2xf32>
      tpu.vector_store %arg10[%c0_33, %c0_34], %44 {strides = array<i32>} : memref<64x2xf32, #tpu.memory_space<vmem>>, vector<64x2xf32>,
    } else {
    }
    %c0 = arith.constant 0 : index
    %c0_1 = arith.constant 0 : index
    %3 = vector.load %arg3[%c0, %c0_1] : memref<32x8xf32, #tpu.memory_space<vmem>>, vector<32x8xf32>
    %c0_2 = arith.constant 0 : index
    %c0_3 = arith.constant 0 : index
    %4 = vector.load %arg4[%c0_2, %c0_3] : memref<32x1xf32, #tpu.memory_space<vmem>>, vector<32x1xf32>
    %c0_4 = arith.constant 0 : index
    %c0_5 = arith.constant 0 : index
    %5 = vector.load %arg5[%c0_4, %c0_5] : memref<64x32xf32, #tpu.memory_space<vmem>>, vector<64x32xf32>
    %c0_6 = arith.constant 0 : index
    %c0_7 = arith.constant 0 : index
    %6 = vector.load %arg6[%c0_6, %c0_7] : memref<64x1xf32, #tpu.memory_space<vmem>>, vector<64x1xf32>
    %c0_8 = arith.constant 0 : index
    %c0_9 = arith.constant 0 : index
    %c0_10 = arith.constant 0 : index
    %7 = vector.load %arg2[%c0_8, %c0_9, %c0_10] : memref<2x8x128xf32, #tpu.memory_space<vmem>>, vector<1x8x128xf32>
    %8 = vector.shape_cast %7 : vector<1x8x128xf32> to vector<8x128xf32>
    %cst = arith.constant dense<0.000000e+00> : vector<32x128xf32>
    %9 = tpu.matmul %3, %8, %cst {dimension_numbers = #tpu.dot_dimension_numbers<[1], [0], [0], [1], [0, 0, 1, 1], [], []>} : vector<32x8xf32>, vector<8x128xf32>, vector<32x128xf32> -> vector<32x128xf32>
    %10 = vector.broadcast %4 : vector<32x1xf32> to vector<32x128xf32>
    %11 = arith.addf %9, %10 : vector<32x128xf32>
    %cst_11 = arith.constant 0.000000e+00 : f32
    %12 = vector.broadcast %cst_11 : f32 to vector<32x128xf32>
    %13 = arith.maximumf %11, %12 : vector<32x128xf32>
    %cst_12 = arith.constant dense<0.000000e+00> : vector<64x128xf32>
    %14 = tpu.matmul %5, %13, %cst_12 {dimension_numbers = #tpu.dot_dimension_numbers<[1], [0], [0], [1], [0, 0, 1, 1], [], []>} : vector<64x32xf32>, vector<32x128xf32>, vector<64x128xf32> -> vector<64x128xf32>
    %15 = vector.broadcast %6 : vector<64x1xf32> to vector<64x128xf32>
    %16 = arith.addf %14, %15 : vector<64x128xf32>
    %cst_13 = arith.constant 0.000000e+00 : f32
    %17 = vector.broadcast %cst_13 : f32 to vector<64x128xf32>
    %18 = arith.maximumf %16, %17 : vector<64x128xf32>
    %cst_14 = arith.constant dense<0xFF800000> : vector<64xf32>
    %19 = vector.multi_reduction <maximumf>, %18, %cst_14 [1] : vector<64x128xf32> to vector<64xf32>
    %20 = vector.shape_cast %19 : vector<64xf32> to vector<64x1xf32>
    %c0_15 = arith.constant 0 : index
    %c0_16 = arith.constant 0 : index
    %21 = vector.load %arg10[%c0_15, %c0_16] : memref<64x2xf32, #tpu.memory_space<vmem>>, vector<64x1xf32>
    %22 = arith.maximumf %21, %20 : vector<64x1xf32>
    %c0_17 = arith.constant 0 : index
    %c0_18 = arith.constant 0 : index
    %23 = vector.load %arg10[%c0_17, %c0_18] : memref<64x2xf32, #tpu.memory_space<vmem>>, vector<64x1xf32>
    tpu.vector_store %arg10[%c0_17, %c0_18], %22 {strides = array<i32>} : memref<64x2xf32, #tpu.memory_space<vmem>>, vector<64x1xf32>,
    %c1 = arith.constant 1 : index
    %c0_19 = arith.constant 0 : index
    %c0_20 = arith.constant 0 : index
    %24 = vector.load %arg2[%c1, %c0_19, %c0_20] : memref<2x8x128xf32, #tpu.memory_space<vmem>>, vector<1x8x128xf32>
    %25 = vector.shape_cast %24 : vector<1x8x128xf32> to vector<8x128xf32>
    %cst_21 = arith.constant dense<0.000000e+00> : vector<32x128xf32>
    %26 = tpu.matmul %3, %25, %cst_21 {dimension_numbers = #tpu.dot_dimension_numbers<[1], [0], [0], [1], [0, 0, 1, 1], [], []>} : vector<32x8xf32>, vector<8x128xf32>, vector<32x128xf32> -> vector<32x128xf32>
    %27 = vector.broadcast %4 : vector<32x1xf32> to vector<32x128xf32>
    %28 = arith.addf %26, %27 : vector<32x128xf32>
    %cst_22 = arith.constant 0.000000e+00 : f32
    %29 = vector.broadcast %cst_22 : f32 to vector<32x128xf32>
    %30 = arith.maximumf %28, %29 : vector<32x128xf32>
    %cst_23 = arith.constant dense<0.000000e+00> : vector<64x128xf32>
    %31 = tpu.matmul %5, %30, %cst_23 {dimension_numbers = #tpu.dot_dimension_numbers<[1], [0], [0], [1], [0, 0, 1, 1], [], []>} : vector<64x32xf32>, vector<32x128xf32>, vector<64x128xf32> -> vector<64x128xf32>
    %32 = vector.broadcast %6 : vector<64x1xf32> to vector<64x128xf32>
    %33 = arith.addf %31, %32 : vector<64x128xf32>
    %cst_24 = arith.constant 0.000000e+00 : f32
    %34 = vector.broadcast %cst_24 : f32 to vector<64x128xf32>
    %35 = arith.maximumf %33, %34 : vector<64x128xf32>
    %cst_25 = arith.constant dense<0xFF800000> : vector<64xf32>
    %36 = vector.multi_reduction <maximumf>, %35, %cst_25 [1] : vector<64x128xf32> to vector<64xf32>
    %37 = vector.shape_cast %36 : vector<64xf32> to vector<64x1xf32>
    %c0_26 = arith.constant 0 : index
    %c1_27 = arith.constant 1 : index
    %38 = vector.load %arg10[%c0_26, %c1_27] : memref<64x2xf32, #tpu.memory_space<vmem>>, vector<64x1xf32>
    %39 = arith.maximumf %38, %37 : vector<64x1xf32>
    %c0_28 = arith.constant 0 : index
    %c1_29 = arith.constant 1 : index
    %40 = vector.load %arg10[%c0_28, %c1_29] : memref<64x2xf32, #tpu.memory_space<vmem>>, vector<64x1xf32>
    tpu.vector_store %arg10[%c0_28, %c1_29], %39 {strides = array<i32>} : memref<64x2xf32, #tpu.memory_space<vmem>>, vector<64x1xf32>,
    %c0_i32_30 = arith.constant 0 : i32
    %41 = arith.cmpi eq, %arg1, %c0_i32_30 : i32
    %42 = arith.extui %41 : i1 to i32
    %c0_i32_31 = arith.constant 0 : i32
    %43 = arith.cmpi ne, %42, %c0_i32_31 : i32
    scf.if %43 {
      %c0_32 = arith.constant 0 : index
      %c0_33 = arith.constant 0 : index
      %44 = vector.load %arg7[%c0_32, %c0_33] : memref<64x128xf32, #tpu.memory_space<vmem>>, vector<64x128xf32>
      %c0_34 = arith.constant 0 : index
      %c0_35 = arith.constant 0 : index
      %45 = vector.load %arg8[%c0_34, %c0_35] : memref<1x128xf32, #tpu.memory_space<vmem>>, vector<1x128xf32>
      %c0_36 = arith.constant 0 : index
      %c0_37 = arith.constant 0 : index
      %46 = vector.load %arg10[%c0_36, %c0_37] : memref<64x2xf32, #tpu.memory_space<vmem>>, vector<64x1xf32>
      %47 = vector.broadcast %46 : vector<64x1xf32> to vector<64x128xf32>
      %48 = arith.mulf %44, %47 : vector<64x128xf32>
      %cst_38 = arith.constant dense<0.000000e+00> : vector<128xf32>
      %49 = vector.multi_reduction <add>, %48, %cst_38 [0] : vector<64x128xf32> to vector<128xf32>
      %50 = vector.shape_cast %49 : vector<128xf32> to vector<1x128xf32>
      %51 = arith.addf %50, %45 : vector<1x128xf32>
      %c0_39 = arith.constant 0 : index
      %c0_40 = arith.constant 0 : index
      %52 = vector.load %arg9[%c0_39, %c0_40] : memref<2x128xf32, #tpu.memory_space<vmem>>, vector<1x128xf32>
      tpu.vector_store %arg9[%c0_39, %c0_40], %51 {strides = array<i32>} : memref<2x128xf32, #tpu.memory_space<vmem>>, vector<1x128xf32>,
      %c0_41 = arith.constant 0 : index
      %c1_42 = arith.constant 1 : index
      %53 = vector.load %arg10[%c0_41, %c1_42] : memref<64x2xf32, #tpu.memory_space<vmem>>, vector<64x1xf32>
      %54 = vector.broadcast %53 : vector<64x1xf32> to vector<64x128xf32>
      %55 = arith.mulf %44, %54 : vector<64x128xf32>
      %cst_43 = arith.constant dense<0.000000e+00> : vector<128xf32>
      %56 = vector.multi_reduction <add>, %55, %cst_43 [0] : vector<64x128xf32> to vector<128xf32>
      %57 = vector.shape_cast %56 : vector<128xf32> to vector<1x128xf32>
      %58 = arith.addf %57, %45 : vector<1x128xf32>
      %c1_44 = arith.constant 1 : index
      %c0_45 = arith.constant 0 : index
      %59 = vector.load %arg9[%c1_44, %c0_45] : memref<2x128xf32, #tpu.memory_space<vmem>>, vector<1x128xf32>
      tpu.vector_store %arg9[%c1_44, %c0_45], %58 {strides = array<i32>} : memref<2x128xf32, #tpu.memory_space<vmem>>, vector<1x128xf32>,
    } else {
    }
    return
  }
  func.func @transform_0(%arg0: i32, %arg1: i32) -> (i32, i32, i32) {
    %c0_i32 = arith.constant 0 : i32
    %c0_i32_0 = arith.constant 0 : i32
    return %arg0, %c0_i32, %arg1 : i32, i32, i32
  }
  func.func @transform_1(%arg0: i32, %arg1: i32) -> (i32, i32) {
    %c0_i32 = arith.constant 0 : i32
    %c0_i32_0 = arith.constant 0 : i32
    %c0_i32_1 = arith.constant 0 : i32
    return %c0_i32, %c0_i32_0 : i32, i32
  }
  func.func @transform_2(%arg0: i32, %arg1: i32) -> (i32, i32) {
    %c0_i32 = arith.constant 0 : i32
    %c0_i32_0 = arith.constant 0 : i32
    %c0_i32_1 = arith.constant 0 : i32
    return %c0_i32, %c0_i32_0 : i32, i32
  }
  func.func @transform_3(%arg0: i32, %arg1: i32) -> (i32, i32) {
    %c0_i32 = arith.constant 0 : i32
    %c0_i32_0 = arith.constant 0 : i32
    %c0_i32_1 = arith.constant 0 : i32
    return %c0_i32, %c0_i32_0 : i32, i32
  }
  func.func @transform_4(%arg0: i32, %arg1: i32) -> (i32, i32) {
    %c0_i32 = arith.constant 0 : i32
    %c0_i32_0 = arith.constant 0 : i32
    %c0_i32_1 = arith.constant 0 : i32
    return %c0_i32, %c0_i32_0 : i32, i32
  }
  func.func @transform_5(%arg0: i32, %arg1: i32) -> (i32, i32) {
    %c0_i32 = arith.constant 0 : i32
    %c0_i32_0 = arith.constant 0 : i32
    %c0_i32_1 = arith.constant 0 : i32
    return %c0_i32, %c0_i32_0 : i32, i32
  }
  func.func @transform_6(%arg0: i32, %arg1: i32) -> (i32, i32) {
    %c0_i32 = arith.constant 0 : i32
    %c0_i32_0 = arith.constant 0 : i32
    %c0_i32_1 = arith.constant 0 : i32
    return %c0_i32, %c0_i32_0 : i32, i32
  }
  func.func @transform_7(%arg0: i32, %arg1: i32) -> (i32, i32) {
    %c0_i32 = arith.constant 0 : i32
    %c0_i32_0 = arith.constant 0 : i32
    return %arg0, %c0_i32 : i32, i32
  }
}

</mosaic_0001>

<llo_original>
// kernel: drop_attack_forward.1
$region0: #{drop_attack_forward.1}
  #allocation0 [shape = 'u32[]', space=smem, size = 0x4, offset = 0x4, fixed_abs, tag = 'smem constant byte address 0x4 - core index']
  #allocation1 [shape = 'u32[144,128]{1,0:T(1,128)}', space=vmem, size = 0x12000, scoped, tag = 'internal scratch']
  #allocation2 [shape = 'f32[64,2]{1,0:T(8,128)}', space=vmem, size = 0x8000, scoped, tag = 'scratch operand']
  %s0 = inlined_call_operand.vmem [shape: f32[2,8,128], index: 0, kind: input, shape index: {}]
  %s1 = inlined_call_operand.vmem [shape: f32[32,8], index: 1, kind: input, shape index: {}]
  %s2 = inlined_call_operand.vmem [shape: f32[32,1], index: 2, kind: input, shape index: {}]
  %s3 = inlined_call_operand.vmem [shape: f32[64,32], index: 3, kind: input, shape index: {}]
  %s4 = inlined_call_operand.vmem [shape: f32[64,1], index: 4, kind: input, shape index: {}]
  %s5 = inlined_call_operand.vmem [shape: f32[64,128], index: 5, kind: input, shape index: {}]
  %s6 = inlined_call_operand.vmem [shape: f32[1,128], index: 6, kind: input, shape index: {}]
  %s7 = inlined_call_operand.vmem [shape: f32[2,128], index: 7, kind: output, shape index: {}]
  %s8 = sld [smem:[#allocation0]]
  $region46: #{drop_attack_forward.1} parent=0
    _
  %s10 = ssub.s32 1, %s8
  %s11 = scalar_select 0, %s10, %s8
  // Predicated region
  $region2: #{drop_attack_forward.1} parent=0 // pred_check
    _
  $region3: #{drop_attack_forward.1} parent=0 // pred_check_branch
    %13 = sbr.rel (0) target = $region5
  $region4: #{drop_attack_forward.1} parent=0 // pred_region
    _
  $region5: #{drop_attack_forward.1} parent=0 // pred_fallthru
    _
  // Predicated region
  $region6: #{drop_attack_forward.1} parent=0 // pred_check
    _
  $region7: #{drop_attack_forward.1} parent=0 // pred_check_branch
    %15 = sbr.rel (0) target = $region9
  $region8: #{drop_attack_forward.1} parent=0 // pred_region
    _
  $region9: #{drop_attack_forward.1} parent=0 // pred_fallthru
    _
  // Predicated region
  $region10: #{drop_attack_forward.1} parent=0 // pred_check
    _
  $region11: #{drop_attack_forward.1} parent=0 // pred_check_branch
    %17 = sbr.rel (0) target = $region13
  $region12: #{drop_attack_forward.1} parent=0 // pred_region
    _
  $region13: #{drop_attack_forward.1} parent=0 // pred_fallthru
    _
  // Predicated region
  $region14: #{drop_attack_forward.1} parent=0 // pred_check
    _
  $region15: #{drop_attack_forward.1} parent=0 // pred_check_branch
    %19 = sbr.rel (0) target = $region17
  $region16: #{drop_attack_forward.1} parent=0 // pred_region
    _
  $region17: #{drop_attack_forward.1} parent=0 // pred_fallthru
    _
  // Predicated region
  $region18: #{drop_attack_forward.1} parent=0 // pred_check
    _
  $region19: #{drop_attack_forward.1} parent=0 // pred_check_branch
    %21 = sbr.rel (0) target = $region21
  $region20: #{drop_attack_forward.1} parent=0 // pred_region
    _
  $region21: #{drop_attack_forward.1} parent=0 // pred_fallthru
    _
  // Predicated region
  $region22: #{drop_attack_forward.1} parent=0 // pred_check
    _
  $region23: #{drop_attack_forward.1} parent=0 // pred_check_branch
    %23 = sbr.rel (0) target = $region25
  $region24: #{drop_attack_forward.1} parent=0 // pred_region
    _
  $region25: #{drop_attack_forward.1} parent=0 // pred_fallthru
    _
  // Predicated region
  $region26: #{drop_attack_forward.1} parent=0 // pred_check
    _
  $region27: #{drop_attack_forward.1} parent=0 // pred_check_branch
    %25 = sbr.rel (0) target = $region29
  $region28: #{drop_attack_forward.1} parent=0 // pred_region
    _
  $region29: #{drop_attack_forward.1} parent=0 // pred_fallthru
    _
  %p26 = scmp.eq.s32.totalorder 0, 0
  // Predicated region
  $region30: #{drop_attack_forward.1} parent=0 // pred_check
    %p27 = pneg %p26
  $region31: #{drop_attack_forward.1} parent=0 // pred_check_branch
    %29 = sbr.rel (%p27) target = $region33
  $region32: #{drop_attack_forward.1} parent=0 // pred_region
    %vm30 = vcmask 15360
    %31 = vst.msk [vmem:[#allocation2] sm:$0xff] %vm30, -inf
    %32 = vst.msk [vmem:[#allocation2 + $0x8] sm:$0xff] %vm30, -inf
    %33 = vst.msk [vmem:[#allocation2 + $0x10] sm:$0xff] %vm30, -inf
    %34 = vst.msk [vmem:[#allocation2 + $0x18] sm:$0xff] %vm30, -inf
    %35 = vst.msk [vmem:[#allocation2 + $0x20] sm:$0xff] %vm30, -inf
    %36 = vst.msk [vmem:[#allocation2 + $0x28] sm:$0xff] %vm30, -inf
    %37 = vst.msk [vmem:[#allocation2 + $0x30] sm:$0xff] %vm30, -inf
    %38 = vst.msk [vmem:[#allocation2 + $0x38] sm:$0xff] %vm30, -inf
  $region33: #{drop_attack_forward.1} parent=0 // pred_fallthru
    _
  %v39 = vld [vmem:[%s1] sm:$0xff]
  %v40 = vld [vmem:[%s1 + $0x8] sm:$0xff]
  %v41 = vld [vmem:[%s1 + $0x10] sm:$0xff]
  %v42 = vld [vmem:[%s1 + $0x18] sm:$0xff]
  %v43 = vld [vmem:[%s2] sm:$0xff]
  %v44 = vld [vmem:[%s2 + $0x8] sm:$0xff]
  %v45 = vld [vmem:[%s2 + $0x10] sm:$0xff]
  %v46 = vld [vmem:[%s2 + $0x18] sm:$0xff]
  %v47 = vld [vmem:[%s3] sm:$0xff]
  %v48 = vld [vmem:[%s3 + $0x8] sm:$0xff]
  %v49 = vld [vmem:[%s3 + $0x10] sm:$0xff]
  %v50 = vld [vmem:[%s3 + $0x18] sm:$0xff]
  %v51 = vld [vmem:[%s3 + $0x20] sm:$0xff]
  %v52 = vld [vmem:[%s3 + $0x28] sm:$0xff]
  %v53 = vld [vmem:[%s3 + $0x30] sm:$0xff]
  %v54 = vld [vmem:[%s3 + $0x38] sm:$0xff]
  %v55 = vld [vmem:[%s4] sm:$0xff]
  %v56 = vld [vmem:[%s4 + $0x8] sm:$0xff]
  %v57 = vld [vmem:[%s4 + $0x10] sm:$0xff]
  %v58 = vld [vmem:[%s4 + $0x18] sm:$0xff]
  %v59 = vld [vmem:[%s4 + $0x20] sm:$0xff]
  %v60 = vld [vmem:[%s4 + $0x28] sm:$0xff]
  %v61 = vld [vmem:[%s4 + $0x30] sm:$0xff]
  %v62 = vld [vmem:[%s4 + $0x38] sm:$0xff]
  %v63 = vld [vmem:[%s0] sm:$0xff]
  %65 = vset.pattern.permute.xlu0 0
  %66 = vperm.xlu0 %65, %v43
  %v67 = vpop.permute.xlu0 %66
  %70 = vset.pattern.permute.xlu0 0
  %71 = vperm.xlu0 %70, %v44
  %v72 = vpop.permute.xlu0 %71
  %75 = vset.pattern.permute.xlu0 0
  %76 = vperm.xlu0 %75, %v45
  %v77 = vpop.permute.xlu0 %76
  %80 = vset.pattern.permute.xlu0 0
  %81 = vperm.xlu0 %80, %v46
  %v82 = vpop.permute.xlu0 %81
  %vm84 = vcmask 64512
  %v86 = vsel %vm84, %v39, 0
  %v89 = vsel %vm84, %v40, 0
  %v92 = vsel %vm84, %v41, 0
  %v95 = vsel %vm84, %v42, 0
  %97 = vmatprep.subr.mxu0 0.0
  %98 = vmatpush1.msra.mxu0 %v63
  %99 = vmatprep.subr.mxu0 0.0
  %100 = vmatpush1.msra.mxu0 0.0
  %101 = vmatprep.subr.mxu0 0.0
  %102 = vmatpush1.msra.mxu0 0.0
  %103 = vmatprep.subr.mxu0 0.0
  %104 = vmatpush1.msra.mxu0 0.0
  %105 = vmatprep.subr.mxu0 0.0
  %106 = vmatpush1.msra.mxu0 0.0
  %107 = vmatprep.subr.mxu0 0.0
  %108 = vmatpush1.msra.mxu0 0.0
  %109 = vmatprep.subr.mxu0 0.0
  %110 = vmatpush1.msra.mxu0 0.0
  %111 = vmatprep.subr.mxu0 0.0
  %112 = vmatpush1.msra.mxu0 0.0
  %113 = vmatprep.subr.mxu0 0.0
  %114 = vmatpush1.msra.mxu0 0.0
  %115 = vmatprep.subr.mxu0 0.0
  %116 = vmatpush1.msra.mxu0 0.0
  %117 = vmatprep.subr.mxu0 0.0
  %118 = vmatpush1.msra.mxu0 0.0
  %119 = vmatprep.subr.mxu0 0.0
  %120 = vmatpush1.msra.mxu0 0.0
  %121 = vmatprep.subr.mxu0 0.0
  %122 = vmatpush1.msra.mxu0 0.0
  %123 = vmatprep.subr.mxu0 0.0
  %124 = vmatpush1.msra.mxu0 0.0
  %125 = vmatprep.subr.mxu0 0.0
  %126 = vmatpush1.msra.mxu0 0.0
  %127 = vmatprep.subr.mxu0 0.0
  %128 = vmatpush1.msra.mxu0 0.0
  %129 = vmatprep.subr.mxu0 0.0
  %130 = vmatpush1.msra.mxu0 0.0
  %131 = vmatprep.subr.mxu0 0.0
  %132 = vmatpush1.msra.mxu0 0.0
  %133 = vmatprep.subr.mxu0 0.0
  %134 = vmatpush1.msra.mxu0 0.0
  %135 = vmatprep.subr.mxu0 0.0
  %136 = vmatpush1.msra.mxu0 0.0
  %137 = vmatprep.subr.mxu0 0.0
  %138 = vmatpush1.msra.mxu0 0.0
  %139 = vmatprep.subr.mxu0 0.0
  %140 = vmatpush1.msra.mxu0 0.0
  %141 = vmatprep.subr.mxu0 0.0
  %142 = vmatpush1.msra.mxu0 0.0
  %143 = vmatprep.subr.mxu0 0.0
  %144 = vmatpush1.msra.mxu0 0.0
  %145 = vmatprep.subr.mxu0 0.0
  %146 = vmatpush1.msra.mxu0 0.0
  %147 = vmatprep.subr.mxu0 0.0
  %148 = vmatpush1.msra.mxu0 0.0
  %149 = vmatprep.subr.mxu0 0.0
  %150 = vmatpush1.msra.mxu0 0.0
  %151 = vmatprep.subr.mxu0 0.0
  %152 = vmatpush1.msra.mxu0 0.0
  %153 = vmatprep.subr.mxu0 0.0
  %154 = vmatpush1.msra.mxu0 0.0
  %155 = vmatprep.subr.mxu0 0.0
  %156 = vmatpush1.msra.mxu0 0.0
  %157 = vmatprep.subr.mxu0 0.0
  %158 = vmatpush1.msra.mxu0 0.0
  %159 = vmatprep.subr.mxu0 0.0
  %160 = vmatpush1.msra.mxu0 0.0
  %161 = vmatprep.mubr.f32.mxu0 0.0
  %162 = vmatmul.mubr.f32.gmra.mrb[0].mxu0 %v86
  %v163 = vpop.f32.mrb[0].mxu0
  %v164 = vadd.f32 %v67, %v163
  %v165 = vpop.f32.mrb[0].mxu0
  %166 = vmatprep.mubr.f32.mxu0 0.0
  %167 = vmatmul.mubr.f32.gmra.mrb[0].mxu0 %v89
  %v168 = vpop.f32.mrb[0].mxu0
  %v169 = vadd.f32 %v72, %v168
  %v170 = vpop.f32.mrb[0].mxu0
  %171 = vmatprep.mubr.f32.mxu0 0.0
  %172 = vmatmul.mubr.f32.gmra.mrb[0].mxu0 %v92
  %v173 = vpop.f32.mrb[0].mxu0
  %v174 = vadd.f32 %v77, %v173
  %v175 = vpop.f32.mrb[0].mxu0
  %176 = vmatprep.mubr.f32.mxu0 0.0
  %177 = vmatmul.mubr.f32.gmra.mrb[0].mxu0 %v95
  %v178 = vpop.f32.mrb[0].mxu0
  %v179 = vadd.f32 %v82, %v178
  %v180 = vpop.f32.mrb[0].mxu0
  %181 = vdwg.mxu0
  %v182 = vmax.f32 %v164, 0.0
  %v183 = vmax.f32 %v169, 0.0
  %v184 = vmax.f32 %v174, 0.0
  %v185 = vmax.f32 %v179, 0.0
  %187 = vset.pattern.permute.xlu0 0
  %188 = vperm.xlu0 %187, %v55
  %v189 = vpop.permute.xlu0 %188
  %192 = vset.pattern.permute.xlu0 0
  %193 = vperm.xlu0 %192, %v56
  %v194 = vpop.permute.xlu0 %193
  %197 = vset.pattern.permute.xlu0 0
  %198 = vperm.xlu0 %197, %v57
  %v199 = vpop.permute.xlu0 %198
  %202 = vset.pattern.permute.xlu0 0
  %203 = vperm.xlu0 %202, %v58
  %v204 = vpop.permute.xlu0 %203
  %207 = vset.pattern.permute.xlu0 0
  %208 = vperm.xlu0 %207, %v59
  %v209 = vpop.permute.xlu0 %208
  %212 = vset.pattern.permute.xlu0 0
  %213 = vperm.xlu0 %212, %v60
  %v214 = vpop.permute.xlu0 %213
  %217 = vset.pattern.permute.xlu0 0
  %218 = vperm.xlu0 %217, %v61
  %v219 = vpop.permute.xlu0 %218
  %222 = vset.pattern.permute.xlu0 0
  %223 = vperm.xlu0 %222, %v62
  %v224 = vpop.permute.xlu0 %223
  %vm226 = vcmask 261120
  %v228 = vsel %vm226, %v47, 0
  %v231 = vsel %vm226, %v48, 0
  %v234 = vsel %vm226, %v49, 0
  %v237 = vsel %vm226, %v50, 0
  %v240 = vsel %vm226, %v51, 0
  %v243 = vsel %vm226, %v52, 0
  %v246 = vsel %vm226, %v53, 0
  %v249 = vsel %vm226, %v54, 0
  %251 = vmatprep.subr.mxu0 0.0
  %252 = vmatpush1.msra.mxu0 %v182
  %253 = vmatprep.subr.mxu0 0.0
  %254 = vmatpush1.msra.mxu0 %v183
  %255 = vmatprep.subr.mxu0 0.0
  %256 = vmatpush1.msra.mxu0 %v184
  %257 = vmatprep.subr.mxu0 0.0
  %258 = vmatpush1.msra.mxu0 %v185
  %259 = vmatprep.subr.mxu0 0.0
  %260 = vmatpush1.msra.mxu0 0.0
  %261 = vmatprep.subr.mxu0 0.0
  %262 = vmatpush1.msra.mxu0 0.0
  %263 = vmatprep.subr.mxu0 0.0
  %264 = vmatpush1.msra.mxu0 0.0
  %265 = vmatprep.subr.mxu0 0.0
  %266 = vmatpush1.msra.mxu0 0.0
  %267 = vmatprep.subr.mxu0 0.0
  %268 = vmatpush1.msra.mxu0 0.0
  %269 = vmatprep.subr.mxu0 0.0
  %270 = vmatpush1.msra.mxu0 0.0
  %271 = vmatprep.subr.mxu0 0.0
  %272 = vmatpush1.msra.mxu0 0.0
  %273 = vmatprep.subr.mxu0 0.0
  %274 = vmatpush1.msra.mxu0 0.0
  %275 = vmatprep.subr.mxu0 0.0
  %276 = vmatpush1.msra.mxu0 0.0
  %277 = vmatprep.subr.mxu0 0.0
  %278 = vmatpush1.msra.mxu0 0.0
  %279 = vmatprep.subr.mxu0 0.0
  %280 = vmatpush1.msra.mxu0 0.0
  %281 = vmatprep.subr.mxu0 0.0
  %282 = vmatpush1.msra.mxu0 0.0
  %283 = vmatprep.subr.mxu0 0.0
  %284 = vmatpush1.msra.mxu0 0.0
  %285 = vmatprep.subr.mxu0 0.0
  %286 = vmatpush1.msra.mxu0 0.0
  %287 = vmatprep.subr.mxu0 0.0
  %288 = vmatpush1.msra.mxu0 0.0
  %289 = vmatprep.subr.mxu0 0.0
  %290 = vmatpush1.msra.mxu0 0.0
  %291 = vmatprep.subr.mxu0 0.0
  %292 = vmatpush1.msra.mxu0 0.0
  %293 = vmatprep.subr.mxu0 0.0
  %294 = vmatpush1.msra.mxu0 0.0
  %295 = vmatprep.subr.mxu0 0.0
  %296 = vmatpush1.msra.mxu0 0.0
  %297 = vmatprep.subr.mxu0 0.0
  %298 = vmatpush1.msra.mxu0 0.0
  %299 = vmatprep.subr.mxu0 0.0
  %300 = vmatpush1.msra.mxu0 0.0
  %301 = vmatprep.subr.mxu0 0.0
  %302 = vmatpush1.msra.mxu0 0.0
  %303 = vmatprep.subr.mxu0 0.0
  %304 = vmatpush1.msra.mxu0 0.0
  %305 = vmatprep.subr.mxu0 0.0
  %306 = vmatpush1.msra.mxu0 0.0
  %307 = vmatprep.subr.mxu0 0.0
  %308 = vmatpush1.msra.mxu0 0.0
  %309 = vmatprep.subr.mxu0 0.0
  %310 = vmatpush1.msra.mxu0 0.0
  %311 = vmatprep.subr.mxu0 0.0
  %312 = vmatpush1.msra.mxu0 0.0
  %313 = vmatprep.subr.mxu0 0.0
  %314 = vmatpush1.msra.mxu0 0.0
  %315 = vmatprep.mubr.f32.mxu0 0.0
  %316 = vmatmul.mubr.f32.gmra.mrb[0].mxu0 %v228
  %v317 = vpop.f32.mrb[0].mxu0
  %v318 = vadd.f32 %v189, %v317
  %v319 = vpop.f32.mrb[0].mxu0
  %320 = vmatprep.mubr.f32.mxu0 0.0
  %321 = vmatmul.mubr.f32.gmra.mrb[0].mxu0 %v231
  %v322 = vpop.f32.mrb[0].mxu0
  %v323 = vadd.f32 %v194, %v322
  %v324 = vpop.f32.mrb[0].mxu0
  %325 = vmatprep.mubr.f32.mxu0 0.0
  %326 = vmatmul.mubr.f32.gmra.mrb[0].mxu0 %v234
  %v327 = vpop.f32.mrb[0].mxu0
  %v328 = vadd.f32 %v199, %v327
  %v329 = vpop.f32.mrb[0].mxu0
  %330 = vmatprep.mubr.f32.mxu0 0.0
  %331 = vmatmul.mubr.f32.gmra.mrb[0].mxu0 %v237
  %v332 = vpop.f32.mrb[0].mxu0
  %v333 = vadd.f32 %v204, %v332
  %v334 = vpop.f32.mrb[0].mxu0
  %335 = vmatprep.mubr.f32.mxu0 0.0
  %336 = vmatmul.mubr.f32.gmra.mrb[0].mxu0 %v240
  %v337 = vpop.f32.mrb[0].mxu0
  %v338 = vadd.f32 %v209, %v337
  %v339 = vpop.f32.mrb[0].mxu0
  %340 = vmatprep.mubr.f32.mxu0 0.0
  %341 = vmatmul.mubr.f32.gmra.mrb[0].mxu0 %v243
  %v342 = vpop.f32.mrb[0].mxu0
  %v343 = vadd.f32 %v214, %v342
  %v344 = vpop.f32.mrb[0].mxu0
  %345 = vmatprep.mubr.f32.mxu0 0.0
  %346 = vmatmul.mubr.f32.gmra.mrb[0].mxu0 %v246
  %v347 = vpop.f32.mrb[0].mxu0
  %v348 = vadd.f32 %v219, %v347
  %v349 = vpop.f32.mrb[0].mxu0
  %350 = vmatprep.mubr.f32.mxu0 0.0
  %351 = vmatmul.mubr.f32.gmra.mrb[0].mxu0 %v249
  %v352 = vpop.f32.mrb[0].mxu0
  %v353 = vadd.f32 %v224, %v352
  %v354 = vpop.f32.mrb[0].mxu0
  %355 = vdwg.mxu0
  %v356 = vmax.f32 %v318, 0.0
  %v357 = vmax.f32 %v323, 0.0
  %v358 = vmax.f32 %v328, 0.0
  %v359 = vmax.f32 %v333, 0.0
  %v360 = vmax.f32 %v338, 0.0
  %v361 = vmax.f32 %v343, 0.0
  %v362 = vmax.f32 %v348, 0.0
  %v363 = vmax.f32 %v353, 0.0
  %364 = vmax.xlane.f32.xlu0 %v356
  %v365 = vpop.xlane.xlu0 %364
  %366 = vmax.xlane.f32.xlu0 %v357
  %v367 = vpop.xlane.xlu0 %366
  %368 = vmax.xlane.f32.xlu0 %v358
  %v369 = vpop.xlane.xlu0 %368
  %370 = vmax.xlane.f32.xlu0 %v359
  %v371 = vpop.xlane.xlu0 %370
  %372 = vmax.xlane.f32.xlu0 %v360
  %v373 = vpop.xlane.xlu0 %372
  %374 = vmax.xlane.f32.xlu0 %v361
  %v375 = vpop.xlane.xlu0 %374
  %376 = vmax.xlane.f32.xlu0 %v362
  %v377 = vpop.xlane.xlu0 %376
  %378 = vmax.xlane.f32.xlu0 %v363
  %v379 = vpop.xlane.xlu0 %378
  %v380 = vld [vmem:[#allocation2] sm:$0xff]
  %v381 = vld [vmem:[#allocation2 + $0x8] sm:$0xff]
  %v382 = vld [vmem:[#allocation2 + $0x10] sm:$0xff]
  %v383 = vld [vmem:[#allocation2 + $0x18] sm:$0xff]
  %v384 = vld [vmem:[#allocation2 + $0x20] sm:$0xff]
  %v385 = vld [vmem:[#allocation2 + $0x28] sm:$0xff]
  %v386 = vld [vmem:[#allocation2 + $0x30] sm:$0xff]
  %v387 = vld [vmem:[#allocation2 + $0x38] sm:$0xff]
  %v388 = vmax.f32 %v380, %v365
  %v389 = vmax.f32 %v381, %v367
  %v390 = vmax.f32 %v382, %v369
  %v391 = vmax.f32 %v383, %v371
  %v392 = vmax.f32 %v384, %v373
  %v393 = vmax.f32 %v385, %v375
  %v394 = vmax.f32 %v386, %v377
  %v395 = vmax.f32 %v387, %v379
  %vm396 = vcmask 7168
  %397 = vst.msk [vmem:[#allocation2] sm:$0xff] %vm396, %v388
  %398 = vst.msk [vmem:[#allocation2 + $0x8] sm:$0xff] %vm396, %v389
  %399 = vst.msk [vmem:[#allocation2 + $0x10] sm:$0xff] %vm396, %v390
  %400 = vst.msk [vmem:[#allocation2 + $0x18] sm:$0xff] %vm396, %v391
  %401 = vst.msk [vmem:[#allocation2 + $0x20] sm:$0xff] %vm396, %v392
  %402 = vst.msk [vmem:[#allocation2 + $0x28] sm:$0xff] %vm396, %v393
  %403 = vst.msk [vmem:[#allocation2 + $0x30] sm:$0xff] %vm396, %v394
  %404 = vst.msk [vmem:[#allocation2 + $0x38] sm:$0xff] %vm396, %v395
  %s405 = scalar_lea.vmem %s0, 8
  %v406 = vld [vmem:[%s405] sm:$0xff]
  %407 = vmatprep.subr.mxu0 0.0
  %408 = vmatpush1.msra.mxu0 %v406
  %409 = vmatprep.subr.mxu0 0.0
  %410 = vmatpush1.msra.mxu0 0.0
  %411 = vmatprep.subr.mxu0 0.0
  %412 = vmatpush1.msra.mxu0 0.0
  %413 = vmatprep.subr.mxu0 0.0
  %414 = vmatpush1.msra.mxu0 0.0
  %415 = vmatprep.subr.mxu0 0.0
  %416 = vmatpush1.msra.mxu0 0.0
  %417 = vmatprep.subr.mxu0 0.0
  %418 = vmatpush1.msra.mxu0 0.0
  %419 = vmatprep.subr.mxu0 0.0
  %420 = vmatpush1.msra.mxu0 0.0
  %421 = vmatprep.subr.mxu0 0.0
  %422 = vmatpush1.msra.mxu0 0.0
  %423 = vmatprep.subr.mxu0 0.0
  %424 = vmatpush1.msra.mxu0 0.0
  %425 = vmatprep.subr.mxu0 0.0
  %426 = vmatpush1.msra.mxu0 0.0
  %427 = vmatprep.subr.mxu0 0.0
  %428 = vmatpush1.msra.mxu0 0.0
  %429 = vmatprep.subr.mxu0 0.0
  %430 = vmatpush1.msra.mxu0 0.0
  %431 = vmatprep.subr.mxu0 0.0
  %432 = vmatpush1.msra.mxu0 0.0
  %433 = vmatprep.subr.mxu0 0.0
  %434 = vmatpush1.msra.mxu0 0.0
  %435 = vmatprep.subr.mxu0 0.0
  %436 = vmatpush1.msra.mxu0 0.0
  %437 = vmatprep.subr.mxu0 0.0
  %438 = vmatpush1.msra.mxu0 0.0
  %439 = vmatprep.subr.mxu0 0.0
  %440 = vmatpush1.msra.mxu0 0.0
  %441 = vmatprep.subr.mxu0 0.0
  %442 = vmatpush1.msra.mxu0 0.0
  %443 = vmatprep.subr.mxu0 0.0
  %444 = vmatpush1.msra.mxu0 0.0
  %445 = vmatprep.subr.mxu0 0.0
  %446 = vmatpush1.msra.mxu0 0.0
  %447 = vmatprep.subr.mxu0 0.0
  %448 = vmatpush1.msra.mxu0 0.0
  %449 = vmatprep.subr.mxu0 0.0
  %450 = vmatpush1.msra.mxu0 0.0
  %451 = vmatprep.subr.mxu0 0.0
  %452 = vmatpush1.msra.mxu0 0.0
  %453 = vmatprep.subr.mxu0 0.0
  %454 = vmatpush1.msra.mxu0 0.0
  %455 = vmatprep.subr.mxu0 0.0
  %456 = vmatpush1.msra.mxu0 0.0
  %457 = vmatprep.subr.mxu0 0.0
  %458 = vmatpush1.msra.mxu0 0.0
  %459 = vmatprep.subr.mxu0 0.0
  %460 = vmatpush1.msra.mxu0 0.0
  %461 = vmatprep.subr.mxu0 0.0
  %462 = vmatpush1.msra.mxu0 0.0
  %463 = vmatprep.subr.mxu0 0.0
  %464 = vmatpush1.msra.mxu0 0.0
  %465 = vmatprep.subr.mxu0 0.0
  %466 = vmatpush1.msra.mxu0 0.0
  %467 = vmatprep.subr.mxu0 0.0
  %468 = vmatpush1.msra.mxu0 0.0
  %469 = vmatprep.subr.mxu0 0.0
  %470 = vmatpush1.msra.mxu0 0.0
  %471 = vmatprep.mubr.f32.mxu0 0.0
  %472 = vmatmul.mubr.f32.gmra.mrb[0].mxu0 %v86
  %v473 = vpop.f32.mrb[0].mxu0
  %v474 = vadd.f32 %v67, %v473
  %v475 = vpop.f32.mrb[0].mxu0
  %476 = vmatprep.mubr.f32.mxu0 0.0
  %477 = vmatmul.mubr.f32.gmra.mrb[0].mxu0 %v89
  %v478 = vpop.f32.mrb[0].mxu0
  %v479 = vadd.f32 %v72, %v478
  %v480 = vpop.f32.mrb[0].mxu0
  %481 = vmatprep.mubr.f32.mxu0 0.0
  %482 = vmatmul.mubr.f32.gmra.mrb[0].mxu0 %v92
  %v483 = vpop.f32.mrb[0].mxu0
  %v484 = vadd.f32 %v77, %v483
  %v485 = vpop.f32.mrb[0].mxu0
  %486 = vmatprep.mubr.f32.mxu0 0.0
  %487 = vmatmul.mubr.f32.gmra.mrb[0].mxu0 %v95
  %v488 = vpop.f32.mrb[0].mxu0
  %v489 = vadd.f32 %v82, %v488
  %v490 = vpop.f32.mrb[0].mxu0
  %491 = vdwg.mxu0
  %v492 = vmax.f32 %v474, 0.0
  %v493 = vmax.f32 %v479, 0.0
  %v494 = vmax.f32 %v484, 0.0
  %v495 = vmax.f32 %v489, 0.0
  %496 = vmatprep.subr.mxu0 0.0
  %497 = vmatpush1.msra.mxu0 %v492
  %498 = vmatprep.subr.mxu0 0.0
  %499 = vmatpush1.msra.mxu0 %v493
  %500 = vmatprep.subr.mxu0 0.0
  %501 = vmatpush1.msra.mxu0 %v494
  %502 = vmatprep.subr.mxu0 0.0
  %503 = vmatpush1.msra.mxu0 %v495
  %504 = vmatprep.subr.mxu0 0.0
  %505 = vmatpush1.msra.mxu0 0.0
  %506 = vmatprep.subr.mxu0 0.0
  %507 = vmatpush1.msra.mxu0 0.0
  %508 = vmatprep.subr.mxu0 0.0
  %509 = vmatpush1.msra.mxu0 0.0
  %510 = vmatprep.subr.mxu0 0.0
  %511 = vmatpush1.msra.mxu0 0.0
  %512 = vmatprep.subr.mxu0 0.0
  %513 = vmatpush1.msra.mxu0 0.0
  %514 = vmatprep.subr.mxu0 0.0
  %515 = vmatpush1.msra.mxu0 0.0
  %516 = vmatprep.subr.mxu0 0.0
  %517 = vmatpush1.msra.mxu0 0.0
  %518 = vmatprep.subr.mxu0 0.0
  %519 = vmatpush1.msra.mxu0 0.0
  %520 = vmatprep.subr.mxu0 0.0
  %521 = vmatpush1.msra.mxu0 0.0
  %522 = vmatprep.subr.mxu0 0.0
  %523 = vmatpush1.msra.mxu0 0.0
  %524 = vmatprep.subr.mxu0 0.0
  %525 = vmatpush1.msra.mxu0 0.0
  %526 = vmatprep.subr.mxu0 0.0
  %527 = vmatpush1.msra.mxu0 0.0
  %528 = vmatprep.subr.mxu0 0.0
  %529 = vmatpush1.msra.mxu0 0.0
  %530 = vmatprep.subr.mxu0 0.0
  %531 = vmatpush1.msra.mxu0 0.0
  %532 = vmatprep.subr.mxu0 0.0
  %533 = vmatpush1.msra.mxu0 0.0
  %534 = vmatprep.subr.mxu0 0.0
  %535 = vmatpush1.msra.mxu0 0.0
  %536 = vmatprep.subr.mxu0 0.0
  %537 = vmatpush1.msra.mxu0 0.0
  %538 = vmatprep.subr.mxu0 0.0
  %539 = vmatpush1.msra.mxu0 0.0
  %540 = vmatprep.subr.mxu0 0.0
  %541 = vmatpush1.msra.mxu0 0.0
  %542 = vmatprep.subr.mxu0 0.0
  %543 = vmatpush1.msra.mxu0 0.0
  %544 = vmatprep.subr.mxu0 0.0
  %545 = vmatpush1.msra.mxu0 0.0
  %546 = vmatprep.subr.mxu0 0.0
  %547 = vmatpush1.msra.mxu0 0.0
  %548 = vmatprep.subr.mxu0 0.0
  %549 = vmatpush1.msra.mxu0 0.0
  %550 = vmatprep.subr.mxu0 0.0
  %551 = vmatpush1.msra.mxu0 0.0
  %552 = vmatprep.subr.mxu0 0.0
  %553 = vmatpush1.msra.mxu0 0.0
  %554 = vmatprep.subr.mxu0 0.0
  %555 = vmatpush1.msra.mxu0 0.0
  %556 = vmatprep.subr.mxu0 0.0
  %557 = vmatpush1.msra.mxu0 0.0
  %558 = vmatprep.subr.mxu0 0.0
  %559 = vmatpush1.msra.mxu0 0.0
  %560 = vmatprep.mubr.f32.mxu0 0.0
  %561 = vmatmul.mubr.f32.gmra.mrb[0].mxu0 %v228
  %v562 = vpop.f32.mrb[0].mxu0
  %v563 = vadd.f32 %v189, %v562
  %v564 = vpop.f32.mrb[0].mxu0
  %565 = vmatprep.mubr.f32.mxu0 0.0
  %566 = vmatmul.mubr.f32.gmra.mrb[0].mxu0 %v231
  %v567 = vpop.f32.mrb[0].mxu0
  %v568 = vadd.f32 %v194, %v567
  %v569 = vpop.f32.mrb[0].mxu0
  %570 = vmatprep.mubr.f32.mxu0 0.0
  %571 = vmatmul.mubr.f32.gmra.mrb[0].mxu0 %v234
  %v572 = vpop.f32.mrb[0].mxu0
  %v573 = vadd.f32 %v199, %v572
  %v574 = vpop.f32.mrb[0].mxu0
  %575 = vmatprep.mubr.f32.mxu0 0.0
  %576 = vmatmul.mubr.f32.gmra.mrb[0].mxu0 %v237
  %v577 = vpop.f32.mrb[0].mxu0
  %v578 = vadd.f32 %v204, %v577
  %v579 = vpop.f32.mrb[0].mxu0
  %580 = vmatprep.mubr.f32.mxu0 0.0
  %581 = vmatmul.mubr.f32.gmra.mrb[0].mxu0 %v240
  %v582 = vpop.f32.mrb[0].mxu0
  %v583 = vadd.f32 %v209, %v582
  %v584 = vpop.f32.mrb[0].mxu0
  %585 = vmatprep.mubr.f32.mxu0 0.0
  %586 = vmatmul.mubr.f32.gmra.mrb[0].mxu0 %v243
  %v587 = vpop.f32.mrb[0].mxu0
  %v588 = vadd.f32 %v214, %v587
  %v589 = vpop.f32.mrb[0].mxu0
  %590 = vmatprep.mubr.f32.mxu0 0.0
  %591 = vmatmul.mubr.f32.gmra.mrb[0].mxu0 %v246
  %v592 = vpop.f32.mrb[0].mxu0
  %v593 = vadd.f32 %v219, %v592
  %v594 = vpop.f32.mrb[0].mxu0
  %595 = vmatprep.mubr.f32.mxu0 0.0
  %596 = vmatmul.mubr.f32.gmra.mrb[0].mxu0 %v249
  %v597 = vpop.f32.mrb[0].mxu0
  %v598 = vadd.f32 %v224, %v597
  %v599 = vpop.f32.mrb[0].mxu0
  %600 = vdwg.mxu0
  %v601 = vmax.f32 %v563, 0.0
  %v602 = vmax.f32 %v568, 0.0
  %v603 = vmax.f32 %v573, 0.0
  %v604 = vmax.f32 %v578, 0.0
  %v605 = vmax.f32 %v583, 0.0
  %v606 = vmax.f32 %v588, 0.0
  %v607 = vmax.f32 %v593, 0.0
  %v608 = vmax.f32 %v598, 0.0
  %609 = vmax.xlane.f32.xlu0 %v601
  %v610 = vpop.xlane.xlu0 %609
  %611 = vmax.xlane.f32.xlu0 %v602
  %v612 = vpop.xlane.xlu0 %611
  %613 = vmax.xlane.f32.xlu0 %v603
  %v614 = vpop.xlane.xlu0 %613
  %615 = vmax.xlane.f32.xlu0 %v604
  %v616 = vpop.xlane.xlu0 %615
  %617 = vmax.xlane.f32.xlu0 %v605
  %v618 = vpop.xlane.xlu0 %617
  %619 = vmax.xlane.f32.xlu0 %v606
  %v620 = vpop.xlane.xlu0 %619
  %621 = vmax.xlane.f32.xlu0 %v607
  %v622 = vpop.xlane.xlu0 %621
  %623 = vmax.xlane.f32.xlu0 %v608
  %v624 = vpop.xlane.xlu0 %623
  %v625 = vld [vmem:[#allocation2] sm:$0xff]
  %v626 = vld [vmem:[#allocation2 + $0x8] sm:$0xff]
  %v627 = vld [vmem:[#allocation2 + $0x10] sm:$0xff]
  %v628 = vld [vmem:[#allocation2 + $0x18] sm:$0xff]
  %v629 = vld [vmem:[#allocation2 + $0x20] sm:$0xff]
  %v630 = vld [vmem:[#allocation2 + $0x28] sm:$0xff]
  %v631 = vld [vmem:[#allocation2 + $0x30] sm:$0xff]
  %v632 = vld [vmem:[#allocation2 + $0x38] sm:$0xff]
  %v633 = vmax.f32 %v625, %v610
  %v634 = vmax.f32 %v626, %v612
  %v635 = vmax.f32 %v627, %v614
  %v636 = vmax.f32 %v628, %v616
  %v637 = vmax.f32 %v629, %v618
  %v638 = vmax.f32 %v630, %v620
  %v639 = vmax.f32 %v631, %v622
  %v640 = vmax.f32 %v632, %v624
  %vm641 = vcmask 15368
  %642 = vst.msk [vmem:[#allocation2] sm:$0xff] %vm641, %v633
  %643 = vst.msk [vmem:[#allocation2 + $0x8] sm:$0xff] %vm641, %v634
  %644 = vst.msk [vmem:[#allocation2 + $0x10] sm:$0xff] %vm641, %v635
  %645 = vst.msk [vmem:[#allocation2 + $0x18] sm:$0xff] %vm641, %v636
  %646 = vst.msk [vmem:[#allocation2 + $0x20] sm:$0xff] %vm641, %v637
  %647 = vst.msk [vmem:[#allocation2 + $0x28] sm:$0xff] %vm641, %v638
  %648 = vst.msk [vmem:[#allocation2 + $0x30] sm:$0xff] %vm641, %v639
  %649 = vst.msk [vmem:[#allocation2 + $0x38] sm:$0xff] %vm641, %v640
  // Predicated region
  $region34: #{drop_attack_forward.1} parent=0 // pred_check
    %p650 = pneg %p26
  $region35: #{drop_attack_forward.1} parent=0 // pred_check_branch
    %652 = sbr.rel (%p650) target = $region37
  $region36: #{drop_attack_forward.1} parent=0 // pred_region
    %v653 = vld [vmem:[%s5] sm:$0xff]
    %v654 = vld [vmem:[%s5 + $0x8] sm:$0xff]
    %v655 = vld [vmem:[%s5 + $0x10] sm:$0xff]
    %v656 = vld [vmem:[%s5 + $0x18] sm:$0xff]
    %v657 = vld [vmem:[%s5 + $0x20] sm:$0xff]
    %v658 = vld [vmem:[%s5 + $0x28] sm:$0xff]
    %v659 = vld [vmem:[%s5 + $0x30] sm:$0xff]
    %v660 = vld [vmem:[%s5 + $0x38] sm:$0xff]
    %v661 = vld [vmem:[%s6] sm:$0x1]
    %v662 = vld [vmem:[#allocation2] sm:$0xff]
    %v663 = vld [vmem:[#allocation2 + $0x8] sm:$0xff]
    %v664 = vld [vmem:[#allocation2 + $0x10] sm:$0xff]
    %v665 = vld [vmem:[#allocation2 + $0x18] sm:$0xff]
    %v666 = vld [vmem:[#allocation2 + $0x20] sm:$0xff]
    %v667 = vld [vmem:[#allocation2 + $0x28] sm:$0xff]
    %v668 = vld [vmem:[#allocation2 + $0x30] sm:$0xff]
    %v669 = vld [vmem:[#allocation2 + $0x38] sm:$0xff]
    %671 = vset.pattern.permute.xlu0 0
    %672 = vperm.xlu0 %671, %v662
    %v673 = vpop.permute.xlu0 %672
    %676 = vset.pattern.permute.xlu0 0
    %677 = vperm.xlu0 %676, %v663
    %v678 = vpop.permute.xlu0 %677
    %681 = vset.pattern.permute.xlu0 0
    %682 = vperm.xlu0 %681, %v664
    %v683 = vpop.permute.xlu0 %682
    %686 = vset.pattern.permute.xlu0 0
    %687 = vperm.xlu0 %686, %v665
    %v688 = vpop.permute.xlu0 %687
    %691 = vset.pattern.permute.xlu0 0
    %692 = vperm.xlu0 %691, %v666
    %v693 = vpop.permute.xlu0 %692
    %696 = vset.pattern.permute.xlu0 0
    %697 = vperm.xlu0 %696, %v667
    %v698 = vpop.permute.xlu0 %697
    %701 = vset.pattern.permute.xlu0 0
    %702 = vperm.xlu0 %701, %v668
    %v703 = vpop.permute.xlu0 %702
    %706 = vset.pattern.permute.xlu0 0
    %707 = vperm.xlu0 %706, %v669
    %v708 = vpop.permute.xlu0 %707
    %v710 = vmul.f32 %v653, %v673
    %v711 = vmul.f32 %v654, %v678
    %v712 = vmul.f32 %v655, %v683
    %v713 = vmul.f32 %v656, %v688
    %v714 = vmul.f32 %v657, %v693
    %v715 = vmul.f32 %v658, %v698
    %v716 = vmul.f32 %v659, %v703
    %v717 = vmul.f32 %v660, %v708
    %v718 = vadd.f32 %v710, %v711
    %v719 = vadd.f32 %v718, %v712
    %v720 = vadd.f32 %v719, %v713
    %v721 = vadd.f32 %v720, %v714
    %v722 = vadd.f32 %v721, %v715
    %v723 = vadd.f32 %v722, %v716
    %v724 = vadd.f32 %v723, %v717
    %v725 = vrot.slane %v724, 4
    %v726 = vadd.f32 %v724, %v725
    %v727 = vrot.slane %v726, 2
    %v728 = vadd.f32 %v726, %v727
    %v729 = vrot.slane %v728, 1
    %v730 = vadd.f32 %v728, %v729
    %v731 = vadd.f32 %v730, %v661
    %732 = vst [vmem:[%s7] sm:$0x1] %v731
    %v733 = vld [vmem:[#allocation2] sm:$0xff]
    %v734 = vld [vmem:[#allocation2 + $0x8] sm:$0xff]
    %v735 = vld [vmem:[#allocation2 + $0x10] sm:$0xff]
    %v736 = vld [vmem:[#allocation2 + $0x18] sm:$0xff]
    %v737 = vld [vmem:[#allocation2 + $0x20] sm:$0xff]
    %v738 = vld [vmem:[#allocation2 + $0x28] sm:$0xff]
    %v739 = vld [vmem:[#allocation2 + $0x30] sm:$0xff]
    %v740 = vld [vmem:[#allocation2 + $0x38] sm:$0xff]
    %742 = vset.pattern.permute.xlu0 1
    %743 = vperm.xlu0 %742, %v733
    %v744 = vpop.permute.xlu0 %743
    %747 = vset.pattern.permute.xlu0 1
    %748 = vperm.xlu0 %747, %v734
    %v749 = vpop.permute.xlu0 %748
    %752 = vset.pattern.permute.xlu0 1
    %753 = vperm.xlu0 %752, %v735
    %v754 = vpop.permute.xlu0 %753
    %757 = vset.pattern.permute.xlu0 1
    %758 = vperm.xlu0 %757, %v736
    %v759 = vpop.permute.xlu0 %758
    %762 = vset.pattern.permute.xlu0 1
    %763 = vperm.xlu0 %762, %v737
    %v764 = vpop.permute.xlu0 %763
    %767 = vset.pattern.permute.xlu0 1
    %768 = vperm.xlu0 %767, %v738
    %v769 = vpop.permute.xlu0 %768
    %772 = vset.pattern.permute.xlu0 1
    %773 = vperm.xlu0 %772, %v739
    %v774 = vpop.permute.xlu0 %773
    %777 = vset.pattern.permute.xlu0 1
    %778 = vperm.xlu0 %777, %v740
    %v779 = vpop.permute.xlu0 %778
    %v781 = vmul.f32 %v653, %v744
    %v782 = vmul.f32 %v654, %v749
    %v783 = vmul.f32 %v655, %v754
    %v784 = vmul.f32 %v656, %v759
    %v785 = vmul.f32 %v657, %v764
    %v786 = vmul.f32 %v658, %v769
    %v787 = vmul.f32 %v659, %v774
    %v788 = vmul.f32 %v660, %v779
    %v789 = vadd.f32 %v781, %v782
    %v790 = vadd.f32 %v789, %v783
    %v791 = vadd.f32 %v790, %v784
    %v792 = vadd.f32 %v791, %v785
    %v793 = vadd.f32 %v792, %v786
    %v794 = vadd.f32 %v793, %v787
    %v795 = vadd.f32 %v794, %v788
    %v796 = vrot.slane %v795, 4
    %v797 = vadd.f32 %v795, %v796
    %v798 = vrot.slane %v797, 2
    %v799 = vadd.f32 %v797, %v798
    %v800 = vrot.slane %v799, 1
    %v801 = vadd.f32 %v799, %v800
    %v802 = vadd.f32 %v801, %v661
    %803 = vst [vmem:[%s7 + $0x1] sm:$0x1] %v802
  $region37: #{drop_attack_forward.1} parent=0 // pred_fallthru
    _
  // Predicated region
  $region38: #{drop_attack_forward.1} parent=0 // pred_check
    _
  $region39: #{drop_attack_forward.1} parent=0 // pred_check_branch
    %805 = sbr.rel (0) target = $region41
  $region40: #{drop_attack_forward.1} parent=0 // pred_region
    _
  $region41: #{drop_attack_forward.1} parent=0 // pred_fallthru
    _
  // Predicated region
  $region42: #{drop_attack_forward.1} parent=0 // pred_check
    _
  $region43: #{drop_attack_forward.1} parent=0 // pred_check_branch
    %807 = sbr.rel (0) target = $region45
  $region44: #{drop_attack_forward.1} parent=0 // pred_region
    _
  $region45: #{drop_attack_forward.1} parent=0 // pred_fallthru
    _

</llo_original>
